<compile_context>
chip_gen: v7x
topology: tpu7x:2x2x1
jax: 0.10.0
libtpu: 0.0.40
codegen_flags: <defaults>
</compile_context>

<pallas_src>
import functools

import jax
import jax.numpy as jnp
from jax.experimental import pallas as pl
from jax.experimental.pallas import tpu as pltpu

EPS_IN = 1e-3   # InstanceNorm1d eps in the module
EPS_BN = 1e-5   # BatchNorm1d default eps


def _seg_stats(t):
    """Centered (two-pass) per-row mean / biased variance over the lane (N) axis."""
    mu = jnp.mean(t, axis=-1, keepdims=True)
    d = t - mu
    var = jnp.mean(d * d, axis=-1, keepdims=True)
    return d, var


def _pointcn_kernel(x_ref, v1_ref, w1_ref, v2_ref, w2_ref, *rest, has_shortcut):
    if has_shortcut:
        wsc_ref, o_ref = rest
    else:
        wsc_ref = None
        (o_ref,) = rest

    B, _, N = x_ref.shape

    # unpack packed per-channel vectors
    g1, b1 = v1_ref[:, 0:1], v1_ref[:, 1:2]                       # (C, 1)
    c1b, g2 = v2_ref[:, 0:1], v2_ref[:, 1:2]                      # (Cout, 1)
    b2, c2b = v2_ref[:, 2:3], v2_ref[:, 3:4]                      # (Cout, 1)

    # ---- stage 1: per-(b,c) IN stats + in-kernel BN1 batch variance --------
    xs, ds, vs = [], [], []
    bn1_acc = 0.0
    for b in range(B):                        # B is static & small -> unrolled
        xb = x_ref[b]                         # (C, N), N on lanes
        d, var = _seg_stats(xb)
        xs.append(xb); ds.append(d); vs.append(var)
        bn1_acc = bn1_acc + var / (var + EPS_IN)     # BN batch-var term after IN
    a1 = g1 * jax.lax.rsqrt(bn1_acc * (1.0 / B) + EPS_BN)         # fused BN1 scale

    # fused IN1+BN1 affine + ReLU, laid out as one lane-dense (C, B*N) slab
    h = jnp.concatenate(
        [jnp.maximum(ds[b] * (jax.lax.rsqrt(vs[b] + EPS_IN) * a1) + b1, 0.0)
         for b in range(B)], axis=-1)
    # 1x1 conv #1: one MXU matmul over all batch elements
    h1 = jnp.dot(w1_ref[...], h, preferred_element_type=jnp.float32) + c1b

    # ---- stage 2: per-(b,cout) IN stats + in-kernel BN2 batch variance -----
    ds1, vs1 = [], []
    bn2_acc = 0.0
    for b in range(B):
        d, var = _seg_stats(h1[:, b * N:(b + 1) * N])
        ds1.append(d); vs1.append(var)
        bn2_acc = bn2_acc + var / (var + EPS_IN)
    a2 = g2 * jax.lax.rsqrt(bn2_acc * (1.0 / B) + EPS_BN)

    h2 = jnp.concatenate(
        [jnp.maximum(ds1[b] * (jax.lax.rsqrt(vs1[b] + EPS_IN) * a2) + b2, 0.0)
         for b in range(B)], axis=-1)
    # 1x1 conv #2
    out = jnp.dot(w2_ref[...], h2, preferred_element_type=jnp.float32) + c2b

    # ---- residual -----------------------------------------------------------
    x_all = jnp.concatenate(xs, axis=-1)                           # (C, B*N)
    if has_shortcut:
        bsc = v2_ref[:, 4:5]
        out = out + jnp.dot(wsc_ref[...], x_all,
                            preferred_element_type=jnp.float32) + bsc
    else:
        out = out + x_all           # identity shortcut: plain add, no matmul

    for b in range(B):
        o_ref[b] = out[:, b * N:(b + 1) * N]


def pointcn_forward(x, params):
    """PointCN forward. x: (B, C, N) float32, PyTorch NCW layout (kept end-to-end)."""
    B, C, N = x.shape
    Cout = params['w1'].shape[0]
    has_shortcut = 'wsc' in params

    # Whole problem lives in VMEM for this fused single-call kernel.
    workset = 4 * (2 * B * N * (C + Cout) + Cout * (2 * C + Cout))
    assert workset < 12 * 1024 * 1024, "working set too large for single-call kernel"
    # TODO(synk): for large B*N*(C+Cout), add a tiled 3-phase fallback (grid over
    # B with in-kernel batch-stat accumulators) instead of this assert.

    # Pack the tiny per-channel vectors into two operands (fewer padded VMEM
    # buffers and DMA descriptors than 7 separate (C,1)/(Cout,1) inputs).
    v1 = jnp.concatenate([params['g1'], params['b1']], axis=1)            # (C, 2)
    cols2 = [params['c1b'], params['g2'], params['b2'], params['c2b']]
    if has_shortcut:
        cols2.append(params['bsc'])
    v2 = jnp.concatenate(cols2, axis=1)                                    # (Cout, 4|5)

    args = [x, v1, params['w1'], v2, params['w2']]
    if has_shortcut:
        args.append(params['wsc'])

    mm_flops = 2 * B * N * Cout * (C + Cout + (C if has_shortcut else 0))
    vpu_flops = 14 * B * N * (C + Cout)
    bytes_accessed = 4 * (B * N * (C + Cout) + Cout * (C + Cout)
                          + (Cout * C if has_shortcut else 0)
                          + 2 * C + len(cols2) * Cout)

    vmem_spec = pl.BlockSpec(memory_space=pltpu.MemorySpace.VMEM)
    return pl.pallas_call(
        functools.partial(_pointcn_kernel, has_shortcut=has_shortcut),
        out_shape=jax.ShapeDtypeStruct((B, Cout, N), jnp.float32),
        in_specs=[vmem_spec] * len(args),
        out_specs=vmem_spec,
        compiler_params=pltpu.CompilerParams(
            # Comfortably under v7x's 64 MiB physical VMEM; only raise toward
            # 64-96 MiB on v5e/v6e if the working set is enlarged.
            vmem_limit_bytes=32 * 1024 * 1024),
        cost_estimate=pl.CostEstimate(
            flops=int(mm_flops + vpu_flops),
            transcendentals=int((B + 1) * (C + Cout)),
            bytes_accessed=int(bytes_accessed)),
    )(*args)


def pointcn_reference(x, params):
    """Pure-JAX sequential reference (un-fused math) for the correctness check."""
    def inorm(h):
        mu = jnp.mean(h, axis=2, keepdims=True)
        var = jnp.mean((h - mu) ** 2, axis=2, keepdims=True)
        return (h - mu) * jax.lax.rsqrt(var + EPS_IN)

    def bnorm(h, g, b):
        mu = jnp.mean(h, axis=(0, 2), keepdims=True)
        var = jnp.mean((h - mu) ** 2, axis=(0, 2), keepdims=True)
        return (h - mu) * jax.lax.rsqrt(var + EPS_BN) * g[None] + b[None]

    h = inorm(x)
    h = bnorm(h, params['g1'], params['b1'])
    h = jnp.maximum(h, 0.0)
    h = jnp.einsum('oc,bcn->bon', params['w1'], h) + params['c1b'][None]
    h = inorm(h)
    h = bnorm(h, params['g2'], params['b2'])
    h = jnp.maximum(h, 0.0)
    h = jnp.einsum('oc,bcn->bon', params['w2'], h) + params['c2b'][None]
    if 'wsc' in params:
        sc = jnp.einsum('oc,bcn->bon', params['wsc'], x) + params['bsc'][None]
    else:
        sc = x
    return h + sc


def make_params(channels, out_channels, key):
    ks = jax.random.split(key, 10)
    f = jnp.float32
    p = {
        # BatchNorm1d(channels) affine params, shaped (C, 1) for NCW broadcast
        'g1': (1.0 + 0.1 * jax.random.normal(ks[0], (channels, 1))).astype(f),
        'b1': (0.1 * jax.random.normal(ks[1], (channels, 1))).astype(f),
        # Conv1d(channels -> out_channels, k=1): weight (Cout, Cin), bias (Cout, 1)
        'w1': (0.2 * jax.random.normal(ks[2], (out_channels, channels))).astype(f),
        'c1b': (0.1 * jax.random.normal(ks[3], (out_channels, 1))).astype(f),
        # BatchNorm1d(out_channels)
        'g2': (1.0 + 0.1 * jax.random.normal(ks[4], (out_channels, 1))).astype(f),
        'b2': (0.1 * jax.random.normal(ks[5], (out_channels, 1))).astype(f),
        # Conv1d(out_channels -> out_channels, k=1)
        'w2': (0.2 * jax.random.normal(ks[6], (out_channels, out_channels))).astype(f),
        'c2b': (0.1 * jax.random.normal(ks[7], (out_channels, 1))).astype(f),
    }
    if out_channels != channels:   # shot_cut Conv1d(channels -> out_channels, k=1)
        p['wsc'] = (0.2 * jax.random.normal(ks[8], (out_channels, channels))).astype(f)
        p['bsc'] = (0.1 * jax.random.normal(ks[9], (out_channels, 1))).astype(f)
    return p


if __name__ == "__main__":
    key = jax.random.PRNGKey(0)
    fwd = jax.jit(pointcn_forward)

    # case 1: out_channels != channels -> conv shortcut branch
    B, C, N, Cout = 2, 8, 128, 16
    kx, kp, key = jax.random.split(key, 3)
    x = jax.random.normal(kx, (B, C, N), dtype=jnp.float32)       # PyTorch NCW input
    params = make_params(C, Cout, kp)
    out = jax.block_until_ready(fwd(x, params))
    ref = pointcn_reference(x, params)
    assert out.shape == (B, Cout, N)
    err = float(jnp.max(jnp.abs(out - ref)))
    assert jnp.allclose(out, ref, atol=1e-4, rtol=1e-4), f"max abs err {err}"

    # case 2: out_channels == channels -> identity shortcut (no wsc matmul)
    kx2, kp2 = jax.random.split(key)
    x2 = jax.random.normal(kx2, (B, C, N), dtype=jnp.float32)
    params2 = make_params(C, C, kp2)
    out2 = jax.block_until_ready(fwd(x2, params2))
    ref2 = pointcn_reference(x2, params2)
    err2 = float(jnp.max(jnp.abs(out2 - ref2)))
    assert jnp.allclose(out2, ref2, atol=1e-4, rtol=1e-4), f"max abs err {err2}"

    print("KERNEL_OK")
</pallas_src>

<mosaic_0001>
module attributes {stable_mosaic.version = 11 : i64} {
  func.func @_pointcn_kernel(%arg0: memref<2x8x128xf32, #tpu.memory_space<vmem>>, %arg1: memref<8x2xf32, #tpu.memory_space<vmem>>, %arg2: memref<16x8xf32, #tpu.memory_space<vmem>>, %arg3: memref<16x5xf32, #tpu.memory_space<vmem>>, %arg4: memref<16x16xf32, #tpu.memory_space<vmem>>, %arg5: memref<16x8xf32, #tpu.memory_space<vmem>>, %arg6: memref<2x16x128xf32, #tpu.memory_space<vmem>>) attributes {dimension_semantics = [], scalar_prefetch = 0 : i64, scratch_operands = 0 : i64, tpu.core_type = #tpu.core_type<tc>} {
    %c0 = arith.constant 0 : index
    %c0_0 = arith.constant 0 : index
    %0 = vector.load %arg1[%c0, %c0_0] : memref<8x2xf32, #tpu.memory_space<vmem>>, vector<8x1xf32>
    %c0_1 = arith.constant 0 : index
    %c1 = arith.constant 1 : index
    %1 = vector.load %arg1[%c0_1, %c1] : memref<8x2xf32, #tpu.memory_space<vmem>>, vector<8x1xf32>
    %c0_2 = arith.constant 0 : index
    %c0_3 = arith.constant 0 : index
    %2 = vector.load %arg3[%c0_2, %c0_3] : memref<16x5xf32, #tpu.memory_space<vmem>>, vector<16x1xf32>
    %c0_4 = arith.constant 0 : index
    %c1_5 = arith.constant 1 : index
    %3 = vector.load %arg3[%c0_4, %c1_5] : memref<16x5xf32, #tpu.memory_space<vmem>>, vector<16x1xf32>
    %c0_6 = arith.constant 0 : index
    %c2 = arith.constant 2 : index
    %4 = vector.load %arg3[%c0_6, %c2] : memref<16x5xf32, #tpu.memory_space<vmem>>, vector<16x1xf32>
    %c0_7 = arith.constant 0 : index
    %c3 = arith.constant 3 : index
    %5 = vector.load %arg3[%c0_7, %c3] : memref<16x5xf32, #tpu.memory_space<vmem>>, vector<16x1xf32>
    %c0_8 = arith.constant 0 : index
    %c0_9 = arith.constant 0 : index
    %c0_10 = arith.constant 0 : index
    %6 = vector.load %arg0[%c0_8, %c0_9, %c0_10] : memref<2x8x128xf32, #tpu.memory_space<vmem>>, vector<1x8x128xf32>
    %7 = vector.shape_cast %6 : vector<1x8x128xf32> to vector<8x128xf32>
    %cst = arith.constant dense<0.000000e+00> : vector<8xf32>
    %8 = vector.multi_reduction <add>, %7, %cst [1] : vector<8x128xf32> to vector<8xf32>
    %9 = vector.shape_cast %8 : vector<8xf32> to vector<8x1xf32>
    %cst_11 = arith.constant 1.280000e+02 : f32
    %10 = vector.broadcast %cst_11 : f32 to vector<8x1xf32>
    %11 = arith.divf %9, %10 : vector<8x1xf32>
    %12 = vector.broadcast %11 : vector<8x1xf32> to vector<8x128xf32>
    %13 = arith.subf %7, %12 : vector<8x128xf32>
    %14 = arith.mulf %13, %13 : vector<8x128xf32>
    %cst_12 = arith.constant dense<0.000000e+00> : vector<8xf32>
    %15 = vector.multi_reduction <add>, %14, %cst_12 [1] : vector<8x128xf32> to vector<8xf32>
    %16 = vector.shape_cast %15 : vector<8xf32> to vector<8x1xf32>
    %cst_13 = arith.constant 1.280000e+02 : f32
    %17 = vector.broadcast %cst_13 : f32 to vector<8x1xf32>
    %18 = arith.divf %16, %17 : vector<8x1xf32>
    %cst_14 = arith.constant 1.000000e-03 : f32
    %19 = vector.broadcast %cst_14 : f32 to vector<8x1xf32>
    %20 = arith.addf %18, %19 : vector<8x1xf32>
    %21 = arith.divf %18, %20 : vector<8x1xf32>
    %cst_15 = arith.constant 0.000000e+00 : f32
    %22 = vector.broadcast %cst_15 : f32 to vector<8x1xf32>
    %23 = arith.addf %22, %21 : vector<8x1xf32>
    %c1_16 = arith.constant 1 : index
    %c0_17 = arith.constant 0 : index
    %c0_18 = arith.constant 0 : index
    %24 = vector.load %arg0[%c1_16, %c0_17, %c0_18] : memref<2x8x128xf32, #tpu.memory_space<vmem>>, vector<1x8x128xf32>
    %25 = vector.shape_cast %24 : vector<1x8x128xf32> to vector<8x128xf32>
    %cst_19 = arith.constant dense<0.000000e+00> : vector<8xf32>
    %26 = vector.multi_reduction <add>, %25, %cst_19 [1] : vector<8x128xf32> to vector<8xf32>
    %27 = vector.shape_cast %26 : vector<8xf32> to vector<8x1xf32>
    %cst_20 = arith.constant 1.280000e+02 : f32
    %28 = vector.broadcast %cst_20 : f32 to vector<8x1xf32>
    %29 = arith.divf %27, %28 : vector<8x1xf32>
    %30 = vector.broadcast %29 : vector<8x1xf32> to vector<8x128xf32>
    %31 = arith.subf %25, %30 : vector<8x128xf32>
    %32 = arith.mulf %31, %31 : vector<8x128xf32>
    %cst_21 = arith.constant dense<0.000000e+00> : vector<8xf32>
    %33 = vector.multi_reduction <add>, %32, %cst_21 [1] : vector<8x128xf32> to vector<8xf32>
    %34 = vector.shape_cast %33 : vector<8xf32> to vector<8x1xf32>
    %cst_22 = arith.constant 1.280000e+02 : f32
    %35 = vector.broadcast %cst_22 : f32 to vector<8x1xf32>
    %36 = arith.divf %34, %35 : vector<8x1xf32>
    %cst_23 = arith.constant 1.000000e-03 : f32
    %37 = vector.broadcast %cst_23 : f32 to vector<8x1xf32>
    %38 = arith.addf %36, %37 : vector<8x1xf32>
    %39 = arith.divf %36, %38 : vector<8x1xf32>
    %40 = arith.addf %23, %39 : vector<8x1xf32>
    %cst_24 = arith.constant 5.000000e-01 : f32
    %41 = vector.broadcast %cst_24 : f32 to vector<8x1xf32>
    %42 = arith.mulf %40, %41 : vector<8x1xf32>
    %cst_25 = arith.constant 9.99999974E-6 : f32
    %43 = vector.broadcast %cst_25 : f32 to vector<8x1xf32>
    %44 = arith.addf %42, %43 : vector<8x1xf32>
    %45 = math.rsqrt %44 : vector<8x1xf32>
    %46 = arith.mulf %0, %45 : vector<8x1xf32>
    %cst_26 = arith.constant 1.000000e-03 : f32
    %47 = vector.broadcast %cst_26 : f32 to vector<8x1xf32>
    %48 = arith.addf %18, %47 : vector<8x1xf32>
    %49 = math.rsqrt %48 : vector<8x1xf32>
    %50 = arith.mulf %49, %46 : vector<8x1xf32>
    %51 = vector.broadcast %50 : vector<8x1xf32> to vector<8x128xf32>
    %52 = arith.mulf %13, %51 : vector<8x128xf32>
    %53 = vector.broadcast %1 : vector<8x1xf32> to vector<8x128xf32>
    %54 = arith.addf %52, %53 : vector<8x128xf32>
    %cst_27 = arith.constant 0.000000e+00 : f32
    %55 = vector.broadcast %cst_27 : f32 to vector<8x128xf32>
    %56 = arith.maximumf %54, %55 : vector<8x128xf32>
    %cst_28 = arith.constant 1.000000e-03 : f32
    %57 = vector.broadcast %cst_28 : f32 to vector<8x1xf32>
    %58 = arith.addf %36, %57 : vector<8x1xf32>
    %59 = math.rsqrt %58 : vector<8x1xf32>
    %60 = arith.mulf %59, %46 : vector<8x1xf32>
    %61 = vector.broadcast %60 : vector<8x1xf32> to vector<8x128xf32>
    %62 = arith.mulf %31, %61 : vector<8x128xf32>
    %63 = vector.broadcast %1 : vector<8x1xf32> to vector<8x128xf32>
    %64 = arith.addf %62, %63 : vector<8x128xf32>
    %cst_29 = arith.constant 0.000000e+00 : f32
    %65 = vector.broadcast %cst_29 : f32 to vector<8x128xf32>
    %66 = arith.maximumf %64, %65 : vector<8x128xf32>
    %67 = tpu.concatenate %56, %66 in 1 : vector<8x128xf32>, vector<8x128xf32> -> vector<8x256xf32>
    %c0_30 = arith.constant 0 : index
    %c0_31 = arith.constant 0 : index
    %68 = vector.load %arg2[%c0_30, %c0_31] : memref<16x8xf32, #tpu.memory_space<vmem>>, vector<16x8xf32>
    %cst_32 = arith.constant dense<0.000000e+00> : vector<16x256xf32>
    %69 = tpu.matmul %68, %67, %cst_32 {dimension_numbers = #tpu.dot_dimension_numbers<[1], [0], [0], [1], [0, 0, 1, 1], [], []>} : vector<16x8xf32>, vector<8x256xf32>, vector<16x256xf32> -> vector<16x256xf32>
    %70 = vector.broadcast %2 : vector<16x1xf32> to vector<16x256xf32>
    %71 = arith.addf %69, %70 : vector<16x256xf32>
    %72 = vector.extract_strided_slice %71 {offsets = [0, 0], sizes = [16, 128], strides = [1, 1]} : vector<16x256xf32> to vector<16x128xf32>
    %cst_33 = arith.constant dense<0.000000e+00> : vector<16xf32>
    %73 = vector.multi_reduction <add>, %72, %cst_33 [1] : vector<16x128xf32> to vector<16xf32>
    %74 = vector.shape_cast %73 : vector<16xf32> to vector<16x1xf32>
    %cst_34 = arith.constant 1.280000e+02 : f32
    %75 = vector.broadcast %cst_34 : f32 to vector<16x1xf32>
    %76 = arith.divf %74, %75 : vector<16x1xf32>
    %77 = vector.broadcast %76 : vector<16x1xf32> to vector<16x128xf32>
    %78 = arith.subf %72, %77 : vector<16x128xf32>
    %79 = arith.mulf %78, %78 : vector<16x128xf32>
    %cst_35 = arith.constant dense<0.000000e+00> : vector<16xf32>
    %80 = vector.multi_reduction <add>, %79, %cst_35 [1] : vector<16x128xf32> to vector<16xf32>
    %81 = vector.shape_cast %80 : vector<16xf32> to vector<16x1xf32>
    %cst_36 = arith.constant 1.280000e+02 : f32
    %82 = vector.broadcast %cst_36 : f32 to vector<16x1xf32>
    %83 = arith.divf %81, %82 : vector<16x1xf32>
    %cst_37 = arith.constant 1.000000e-03 : f32
    %84 = vector.broadcast %cst_37 : f32 to vector<16x1xf32>
    %85 = arith.addf %83, %84 : vector<16x1xf32>
    %86 = arith.divf %83, %85 : vector<16x1xf32>
    %cst_38 = arith.constant 0.000000e+00 : f32
    %87 = vector.broadcast %cst_38 : f32 to vector<16x1xf32>
    %88 = arith.addf %87, %86 : vector<16x1xf32>
    %89 = vector.extract_strided_slice %71 {offsets = [0, 128], sizes = [16, 128], strides = [1, 1]} : vector<16x256xf32> to vector<16x128xf32>
    %cst_39 = arith.constant dense<0.000000e+00> : vector<16xf32>
    %90 = vector.multi_reduction <add>, %89, %cst_39 [1] : vector<16x128xf32> to vector<16xf32>
    %91 = vector.shape_cast %90 : vector<16xf32> to vector<16x1xf32>
    %cst_40 = arith.constant 1.280000e+02 : f32
    %92 = vector.broadcast %cst_40 : f32 to vector<16x1xf32>
    %93 = arith.divf %91, %92 : vector<16x1xf32>
    %94 = vector.broadcast %93 : vector<16x1xf32> to vector<16x128xf32>
    %95 = arith.subf %89, %94 : vector<16x128xf32>
    %96 = arith.mulf %95, %95 : vector<16x128xf32>
    %cst_41 = arith.constant dense<0.000000e+00> : vector<16xf32>
    %97 = vector.multi_reduction <add>, %96, %cst_41 [1] : vector<16x128xf32> to vector<16xf32>
    %98 = vector.shape_cast %97 : vector<16xf32> to vector<16x1xf32>
    %cst_42 = arith.constant 1.280000e+02 : f32
    %99 = vector.broadcast %cst_42 : f32 to vector<16x1xf32>
    %100 = arith.divf %98, %99 : vector<16x1xf32>
    %cst_43 = arith.constant 1.000000e-03 : f32
    %101 = vector.broadcast %cst_43 : f32 to vector<16x1xf32>
    %102 = arith.addf %100, %101 : vector<16x1xf32>
    %103 = arith.divf %100, %102 : vector<16x1xf32>
    %104 = arith.addf %88, %103 : vector<16x1xf32>
    %cst_44 = arith.constant 5.000000e-01 : f32
    %105 = vector.broadcast %cst_44 : f32 to vector<16x1xf32>
    %106 = arith.mulf %104, %105 : vector<16x1xf32>
    %cst_45 = arith.constant 9.99999974E-6 : f32
    %107 = vector.broadcast %cst_45 : f32 to vector<16x1xf32>
    %108 = arith.addf %106, %107 : vector<16x1xf32>
    %109 = math.rsqrt %108 : vector<16x1xf32>
    %110 = arith.mulf %3, %109 : vector<16x1xf32>
    %cst_46 = arith.constant 1.000000e-03 : f32
    %111 = vector.broadcast %cst_46 : f32 to vector<16x1xf32>
    %112 = arith.addf %83, %111 : vector<16x1xf32>
    %113 = math.rsqrt %112 : vector<16x1xf32>
    %114 = arith.mulf %113, %110 : vector<16x1xf32>
    %115 = vector.broadcast %114 : vector<16x1xf32> to vector<16x128xf32>
    %116 = arith.mulf %78, %115 : vector<16x128xf32>
    %117 = vector.broadcast %4 : vector<16x1xf32> to vector<16x128xf32>
    %118 = arith.addf %116, %117 : vector<16x128xf32>
    %cst_47 = arith.constant 0.000000e+00 : f32
    %119 = vector.broadcast %cst_47 : f32 to vector<16x128xf32>
    %120 = arith.maximumf %118, %119 : vector<16x128xf32>
    %cst_48 = arith.constant 1.000000e-03 : f32
    %121 = vector.broadcast %cst_48 : f32 to vector<16x1xf32>
    %122 = arith.addf %100, %121 : vector<16x1xf32>
    %123 = math.rsqrt %122 : vector<16x1xf32>
    %124 = arith.mulf %123, %110 : vector<16x1xf32>
    %125 = vector.broadcast %124 : vector<16x1xf32> to vector<16x128xf32>
    %126 = arith.mulf %95, %125 : vector<16x128xf32>
    %127 = vector.broadcast %4 : vector<16x1xf32> to vector<16x128xf32>
    %128 = arith.addf %126, %127 : vector<16x128xf32>
    %cst_49 = arith.constant 0.000000e+00 : f32
    %129 = vector.broadcast %cst_49 : f32 to vector<16x128xf32>
    %130 = arith.maximumf %128, %129 : vector<16x128xf32>
    %131 = tpu.concatenate %120, %130 in 1 : vector<16x128xf32>, vector<16x128xf32> -> vector<16x256xf32>
    %c0_50 = arith.constant 0 : index
    %c0_51 = arith.constant 0 : index
    %132 = vector.load %arg4[%c0_50, %c0_51] : memref<16x16xf32, #tpu.memory_space<vmem>>, vector<16x16xf32>
    %cst_52 = arith.constant dense<0.000000e+00> : vector<16x256xf32>
    %133 = tpu.matmul %132, %131, %cst_52 {dimension_numbers = #tpu.dot_dimension_numbers<[1], [0], [0], [1], [0, 0, 1, 1], [], []>} : vector<16x16xf32>, vector<16x256xf32>, vector<16x256xf32> -> vector<16x256xf32>
    %134 = vector.broadcast %5 : vector<16x1xf32> to vector<16x256xf32>
    %135 = arith.addf %133, %134 : vector<16x256xf32>
    %136 = tpu.concatenate %7, %25 in 1 : vector<8x128xf32>, vector<8x128xf32> -> vector<8x256xf32>
    %c0_53 = arith.constant 0 : index
    %c4 = arith.constant 4 : index
    %137 = vector.load %arg3[%c0_53, %c4] : memref<16x5xf32, #tpu.memory_space<vmem>>, vector<16x1xf32>
    %c0_54 = arith.constant 0 : index
    %c0_55 = arith.constant 0 : index
    %138 = vector.load %arg5[%c0_54, %c0_55] : memref<16x8xf32, #tpu.memory_space<vmem>>, vector<16x8xf32>
    %cst_56 = arith.constant dense<0.000000e+00> : vector<16x256xf32>
    %139 = tpu.matmul %138, %136, %cst_56 {dimension_numbers = #tpu.dot_dimension_numbers<[1], [0], [0], [1], [0, 0, 1, 1], [], []>} : vector<16x8xf32>, vector<8x256xf32>, vector<16x256xf32> -> vector<16x256xf32>
    %140 = arith.addf %135, %139 : vector<16x256xf32>
    %141 = vector.broadcast %137 : vector<16x1xf32> to vector<16x256xf32>
    %142 = arith.addf %140, %141 : vector<16x256xf32>
    %143 = vector.extract_strided_slice %142 {offsets = [0, 0], sizes = [16, 128], strides = [1, 1]} : vector<16x256xf32> to vector<16x128xf32>
    %c0_57 = arith.constant 0 : index
    %c0_58 = arith.constant 0 : index
    %c0_59 = arith.constant 0 : index
    %144 = vector.load %arg6[%c0_57, %c0_58, %c0_59] : memref<2x16x128xf32, #tpu.memory_space<vmem>>, vector<1x16x128xf32>
    %145 = vector.shape_cast %144 : vector<1x16x128xf32> to vector<16x128xf32>
    %146 = vector.shape_cast %143 : vector<16x128xf32> to vector<1x16x128xf32>
    tpu.vector_store %arg6[%c0_57, %c0_58, %c0_59], %146 {strides = array<i32>} : memref<2x16x128xf32, #tpu.memory_space<vmem>>, vector<1x16x128xf32>,
    %147 = vector.extract_strided_slice %142 {offsets = [0, 128], sizes = [16, 128], strides = [1, 1]} : vector<16x256xf32> to vector<16x128xf32>
    %c1_60 = arith.constant 1 : index
    %c0_61 = arith.constant 0 : index
    %c0_62 = arith.constant 0 : index
    %148 = vector.load %arg6[%c1_60, %c0_61, %c0_62] : memref<2x16x128xf32, #tpu.memory_space<vmem>>, vector<1x16x128xf32>
    %149 = vector.shape_cast %148 : vector<1x16x128xf32> to vector<16x128xf32>
    %150 = vector.shape_cast %147 : vector<16x128xf32> to vector<1x16x128xf32>
    tpu.vector_store %arg6[%c1_60, %c0_61, %c0_62], %150 {strides = array<i32>} : memref<2x16x128xf32, #tpu.memory_space<vmem>>, vector<1x16x128xf32>,
    return
  }
}

</mosaic_0001>

<llo_original>
// kernel: pointcn_forward.1
$region0: #{pointcn_forward.1}
  #allocation0 [shape = 'u32[]', space=smem, size = 0x4, offset = 0x4, fixed_abs, tag = 'smem constant byte address 0x4 - core index']
  #allocation1 [shape = 'u32[144,128]{1,0:T(1,128)}', space=vmem, size = 0x12000, scoped, tag = 'internal scratch']
  %s0 = inlined_call_operand.vmem [shape: f32[2,8,128], index: 0, kind: input, shape index: {}]
  %s1 = inlined_call_operand.vmem [shape: f32[8,2], index: 1, kind: input, shape index: {}]
  %s2 = inlined_call_operand.vmem [shape: f32[16,8], index: 2, kind: input, shape index: {}]
  %s3 = inlined_call_operand.vmem [shape: f32[16,5], index: 3, kind: input, shape index: {}]
  %s4 = inlined_call_operand.vmem [shape: f32[16,16], index: 4, kind: input, shape index: {}]
  %s5 = inlined_call_operand.vmem [shape: f32[16,8], index: 5, kind: input, shape index: {}]
  %s6 = inlined_call_operand.hbm [shape: f32[2,16,128], index: 6, kind: output, shape index: {}]
  %s7 = sld [smem:[#allocation0]]
  $region34: #{pointcn_forward.1} parent=0
    _
  %s9 = ssub.s32 1, %s7
  %s10 = scalar_select 0, %s9, %s7
  $region1: #{pointcn_forward.1} parent=0
    #allocation2 [shape = 'u8[16384]{0}', space=vmem, size = 0x4000, scoped, tag = 'output window, operand 0, single buffered']
    #allocation3 [shape = 's32[1]{0}', space=sflag, size = 0x4, scoped, tag = 'scoped memory for pointcn_forward.1']
    %11 = vsyncpa [#allocation3], 0
    // Predicated region
    $region2: #{pointcn_forward.1} parent=1 // pred_check
      _
    $region3: #{pointcn_forward.1} parent=1 // pred_check_branch
      %13 = sbr.rel (0) target = $region5
    $region4: #{pointcn_forward.1} parent=1 // pred_region
      _
    $region5: #{pointcn_forward.1} parent=1 // pred_fallthru
      _
    // Predicated region
    $region6: #{pointcn_forward.1} parent=1 // pred_check
      _
    $region7: #{pointcn_forward.1} parent=1 // pred_check_branch
      %15 = sbr.rel (0) target = $region9
    $region8: #{pointcn_forward.1} parent=1 // pred_region
      _
    $region9: #{pointcn_forward.1} parent=1 // pred_fallthru
      _
    // Predicated region
    $region10: #{pointcn_forward.1} parent=1 // pred_check
      _
    $region11: #{pointcn_forward.1} parent=1 // pred_check_branch
      %17 = sbr.rel (0) target = $region13
    $region12: #{pointcn_forward.1} parent=1 // pred_region
      _
    $region13: #{pointcn_forward.1} parent=1 // pred_fallthru
      _
    // Predicated region
    $region14: #{pointcn_forward.1} parent=1 // pred_check
      _
    $region15: #{pointcn_forward.1} parent=1 // pred_check_branch
      %19 = sbr.rel (0) target = $region17
    $region16: #{pointcn_forward.1} parent=1 // pred_region
      _
    $region17: #{pointcn_forward.1} parent=1 // pred_fallthru
      _
    // Predicated region
    $region18: #{pointcn_forward.1} parent=1 // pred_check
      _
    $region19: #{pointcn_forward.1} parent=1 // pred_check_branch
      %21 = sbr.rel (0) target = $region21
    $region20: #{pointcn_forward.1} parent=1 // pred_region
      _
    $region21: #{pointcn_forward.1} parent=1 // pred_fallthru
      _
    // Predicated region
    $region22: #{pointcn_forward.1} parent=1 // pred_check
      _
    $region23: #{pointcn_forward.1} parent=1 // pred_check_branch
      %23 = sbr.rel (0) target = $region25
    $region24: #{pointcn_forward.1} parent=1 // pred_region
      _
    $region25: #{pointcn_forward.1} parent=1 // pred_fallthru
      _
    %v24 = vld [vmem:[%s1] sm:$0xff]
    %v25 = vld [vmem:[%s3] sm:$0xff]
    %v26 = vld [vmem:[%s3 + $0x8] sm:$0xff]
    %v27 = vld [vmem:[%s0] sm:$0xff]
    %28 = vadd.xlane.f32.xlu0 %v27
    %v29 = vpop.xlane.xlu0 %28
    %v30 = vrcp.pop 128.0
    %v31 = vmul.f32 %v29, %v30
    %v32 = vsub.f32 %v27, %v31
    %v33 = vmul.f32 %v32, %v32
    %34 = vadd.xlane.f32.xlu0 %v33
    %v35 = vpop.xlane.xlu0 %34
    %v36 = vmul.f32 %v35, %v30
    %v37 = vadd.f32 %v36, 0.001
    %v38 = vrcp.pop %v37
    %v39 = vmul.f32 %v36, %v38
    %v40 = vadd.f32 %v39, 0.0
    %s41 = scalar_lea.vmem %s0, 8
    %v42 = vld [vmem:[%s41] sm:$0xff]
    %43 = vadd.xlane.f32.xlu0 %v42
    %v44 = vpop.xlane.xlu0 %43
    %v45 = vmul.f32 %v44, %v30
    %v46 = vsub.f32 %v42, %v45
    %v47 = vmul.f32 %v46, %v46
    %48 = vadd.xlane.f32.xlu0 %v47
    %v49 = vpop.xlane.xlu0 %48
    %v50 = vmul.f32 %v49, %v30
    %v51 = vadd.f32 %v50, 0.001
    %v52 = vrcp.pop %v51
    %v53 = vmul.f32 %v50, %v52
    %v54 = vadd.f32 %v40, %v53
    %v55 = vmul.f32 %v54, 0.5
    %v56 = vadd.f32 %v55, 1e-05
    %v57 = vrsqrt.pop %v56
    %v58 = vmul.f32 %v24, %v57
    %v59 = vrsqrt.pop %v37
    %v60 = vmul.f32 %v59, %v58
    %62 = vset.pattern.permute.xlu0 0
    %63 = vperm.xlu0 %62, %v60
    %v64 = vpop.permute.xlu0 %63
    %v66 = vmul.f32 %v32, %v64
    %68 = vset.pattern.permute.xlu0 1
    %69 = vperm.xlu0 %68, %v24
    %v70 = vpop.permute.xlu0 %69
    %v72 = vadd.f32 %v66, %v70
    %v73 = vmax.f32 %v72, 0.0
    %v74 = vrsqrt.pop %v51
    %v75 = vmul.f32 %v74, %v58
    %77 = vset.pattern.permute.xlu0 0
    %78 = vperm.xlu0 %77, %v75
    %v79 = vpop.permute.xlu0 %78
    %v81 = vmul.f32 %v46, %v79
    %v82 = vadd.f32 %v81, %v70
    %v83 = vmax.f32 %v82, 0.0
    %v84 = vld [vmem:[%s2] sm:$0xff]
    %v85 = vld [vmem:[%s2 + $0x8] sm:$0xff]
    %87 = vset.pattern.permute.xlu0 0
    %88 = vperm.xlu0 %87, %v25
    %v89 = vpop.permute.xlu0 %88
    %92 = vset.pattern.permute.xlu0 0
    %93 = vperm.xlu0 %92, %v26
    %v94 = vpop.permute.xlu0 %93
    %vm96 = vcmask 64512
    %v98 = vsel %vm96, %v84, 0
    %v101 = vsel %vm96, %v85, 0
    %103 = vmatprep.subr.mxu0 %v83
    %104 = vmatpush1.msra.mxu0 %v73
    %105 = vmatprep.subr.mxu0 0.0
    %106 = vmatpush1.msra.mxu0 0.0
    %107 = vmatprep.subr.mxu0 0.0
    %108 = vmatpush1.msra.mxu0 0.0
    %109 = vmatprep.subr.mxu0 0.0
    %110 = vmatpush1.msra.mxu0 0.0
    %111 = vmatprep.subr.mxu0 0.0
    %112 = vmatpush1.msra.mxu0 0.0
    %113 = vmatprep.subr.mxu0 0.0
    %114 = vmatpush1.msra.mxu0 0.0
    %115 = vmatprep.subr.mxu0 0.0
    %116 = vmatpush1.msra.mxu0 0.0
    %117 = vmatprep.subr.mxu0 0.0
    %118 = vmatpush1.msra.mxu0 0.0
    %119 = vmatprep.subr.mxu0 0.0
    %120 = vmatpush1.msra.mxu0 0.0
    %121 = vmatprep.subr.mxu0 0.0
    %122 = vmatpush1.msra.mxu0 0.0
    %123 = vmatprep.subr.mxu0 0.0
    %124 = vmatpush1.msra.mxu0 0.0
    %125 = vmatprep.subr.mxu0 0.0
    %126 = vmatpush1.msra.mxu0 0.0
    %127 = vmatprep.subr.mxu0 0.0
    %128 = vmatpush1.msra.mxu0 0.0
    %129 = vmatprep.subr.mxu0 0.0
    %130 = vmatpush1.msra.mxu0 0.0
    %131 = vmatprep.subr.mxu0 0.0
    %132 = vmatpush1.msra.mxu0 0.0
    %133 = vmatprep.subr.mxu0 0.0
    %134 = vmatpush1.msra.mxu0 0.0
    %135 = vmatprep.subr.mxu0 0.0
    %136 = vmatpush1.msra.mxu0 0.0
    %137 = vmatprep.subr.mxu0 0.0
    %138 = vmatpush1.msra.mxu0 0.0
    %139 = vmatprep.subr.mxu0 0.0
    %140 = vmatpush1.msra.mxu0 0.0
    %141 = vmatprep.subr.mxu0 0.0
    %142 = vmatpush1.msra.mxu0 0.0
    %143 = vmatprep.subr.mxu0 0.0
    %144 = vmatpush1.msra.mxu0 0.0
    %145 = vmatprep.subr.mxu0 0.0
    %146 = vmatpush1.msra.mxu0 0.0
    %147 = vmatprep.subr.mxu0 0.0
    %148 = vmatpush1.msra.mxu0 0.0
    %149 = vmatprep.subr.mxu0 0.0
    %150 = vmatpush1.msra.mxu0 0.0
    %151 = vmatprep.subr.mxu0 0.0
    %152 = vmatpush1.msra.mxu0 0.0
    %153 = vmatprep.subr.mxu0 0.0
    %154 = vmatpush1.msra.mxu0 0.0
    %155 = vmatprep.subr.mxu0 0.0
    %156 = vmatpush1.msra.mxu0 0.0
    %157 = vmatprep.subr.mxu0 0.0
    %158 = vmatpush1.msra.mxu0 0.0
    %159 = vmatprep.subr.mxu0 0.0
    %160 = vmatpush1.msra.mxu0 0.0
    %161 = vmatprep.subr.mxu0 0.0
    %162 = vmatpush1.msra.mxu0 0.0
    %163 = vmatprep.subr.mxu0 0.0
    %164 = vmatpush1.msra.mxu0 0.0
    %165 = vmatprep.subr.mxu0 0.0
    %166 = vmatpush1.msra.mxu0 0.0
    %167 = vmatprep.mubr.f32.mxu0 0.0
    %168 = vmatmul.mubr.f32.gmra.mrb[0].mxu0 %v98
    %v169 = vpop.f32.mrb[0].mxu0
    %v170 = vadd.f32 %v89, %v169
    %v171 = vpop.f32.mrb[0].mxu0
    %v172 = vadd.f32 %v89, %v171
    %173 = vmatprep.mubr.f32.mxu0 0.0
    %174 = vmatmul.mubr.f32.gmra.mrb[0].mxu0 %v101
    %v175 = vpop.f32.mrb[0].mxu0
    %v176 = vadd.f32 %v94, %v175
    %v177 = vpop.f32.mrb[0].mxu0
    %v178 = vadd.f32 %v94, %v177
    %179 = vdwg.mxu0
    %180 = vadd.xlane.f32.xlu0 %v170
    %v181 = vpop.xlane.xlu0 %180
    %182 = vadd.xlane.f32.xlu0 %v176
    %v183 = vpop.xlane.xlu0 %182
    %v184 = vmul.f32 %v181, %v30
    %v185 = vmul.f32 %v183, %v30
    %v186 = vsub.f32 %v170, %v184
    %v187 = vsub.f32 %v176, %v185
    %v188 = vmul.f32 %v186, %v186
    %v189 = vmul.f32 %v187, %v187
    %190 = vadd.xlane.f32.xlu0 %v188
    %v191 = vpop.xlane.xlu0 %190
    %192 = vadd.xlane.f32.xlu0 %v189
    %v193 = vpop.xlane.xlu0 %192
    %v194 = vmul.f32 %v191, %v30
    %v195 = vmul.f32 %v193, %v30
    %v196 = vadd.f32 %v194, 0.001
    %v197 = vadd.f32 %v195, 0.001
    %v198 = vrcp.pop %v196
    %v199 = vmul.f32 %v194, %v198
    %v200 = vrcp.pop %v197
    %v201 = vmul.f32 %v195, %v200
    %v202 = vadd.f32 %v199, 0.0
    %v203 = vadd.f32 %v201, 0.0
    %204 = vadd.xlane.f32.xlu0 %v172
    %v205 = vpop.xlane.xlu0 %204
    %206 = vadd.xlane.f32.xlu0 %v178
    %v207 = vpop.xlane.xlu0 %206
    %v208 = vmul.f32 %v205, %v30
    %v209 = vmul.f32 %v207, %v30
    %v210 = vsub.f32 %v172, %v208
    %v211 = vsub.f32 %v178, %v209
    %v212 = vmul.f32 %v210, %v210
    %v213 = vmul.f32 %v211, %v211
    %214 = vadd.xlane.f32.xlu0 %v212
    %v215 = vpop.xlane.xlu0 %214
    %216 = vadd.xlane.f32.xlu0 %v213
    %v217 = vpop.xlane.xlu0 %216
    %v218 = vmul.f32 %v215, %v30
    %v219 = vmul.f32 %v217, %v30
    %v220 = vadd.f32 %v218, 0.001
    %v221 = vadd.f32 %v219, 0.001
    %v222 = vrcp.pop %v220
    %v223 = vmul.f32 %v218, %v222
    %v224 = vrcp.pop %v221
    %v225 = vmul.f32 %v219, %v224
    %v226 = vadd.f32 %v202, %v223
    %v227 = vadd.f32 %v203, %v225
    %v228 = vmul.f32 %v226, 0.5
    %v229 = vmul.f32 %v227, 0.5
    %v230 = vadd.f32 %v228, 1e-05
    %v231 = vadd.f32 %v229, 1e-05
    %v232 = vrsqrt.pop %v230
    %v233 = vrsqrt.pop %v231
    %v234 = vmul.f32 %v25, %v232
    %v235 = vmul.f32 %v26, %v233
    %v236 = vrsqrt.pop %v196
    %v237 = vrsqrt.pop %v197
    %v238 = vmul.f32 %v236, %v234
    %v239 = vmul.f32 %v237, %v235
    %241 = vset.pattern.permute.xlu0 1
    %242 = vperm.xlu0 %241, %v238
    %v243 = vpop.permute.xlu0 %242
    %246 = vset.pattern.permute.xlu0 1
    %247 = vperm.xlu0 %246, %v239
    %v248 = vpop.permute.xlu0 %247
    %v250 = vmul.f32 %v186, %v243
    %v251 = vmul.f32 %v187, %v248
    %252 = vset.pattern.permute.xlu0 2
    %253 = vperm.xlu0 %252, %v25
    %v254 = vpop.permute.xlu0 %253
    %256 = vset.pattern.permute.xlu0 2
    %257 = vperm.xlu0 %256, %v26
    %v258 = vpop.permute.xlu0 %257
    %v260 = vadd.f32 %v250, %v254
    %v261 = vadd.f32 %v251, %v258
    %v262 = vmax.f32 %v260, 0.0
    %v263 = vmax.f32 %v261, 0.0
    %v264 = vrsqrt.pop %v220
    %v265 = vrsqrt.pop %v221
    %v266 = vmul.f32 %v264, %v234
    %v267 = vmul.f32 %v265, %v235
    %269 = vset.pattern.permute.xlu0 1
    %270 = vperm.xlu0 %269, %v266
    %v271 = vpop.permute.xlu0 %270
    %274 = vset.pattern.permute.xlu0 1
    %275 = vperm.xlu0 %274, %v267
    %v276 = vpop.permute.xlu0 %275
    %v278 = vmul.f32 %v210, %v271
    %v279 = vmul.f32 %v211, %v276
    %v280 = vadd.f32 %v278, %v254
    %v281 = vadd.f32 %v279, %v258
    %v282 = vmax.f32 %v280, 0.0
    %v283 = vmax.f32 %v281, 0.0
    %v284 = vld [vmem:[%s4] sm:$0xff]
    %v285 = vld [vmem:[%s4 + $0x8] sm:$0xff]
    %286 = vset.pattern.permute.xlu0 3
    %287 = vperm.xlu0 %286, %v25
    %v288 = vpop.permute.xlu0 %287
    %290 = vset.pattern.permute.xlu0 3
    %291 = vperm.xlu0 %290, %v26
    %v292 = vpop.permute.xlu0 %291
    %vm294 = vcmask 130048
    %v296 = vsel %vm294, %v284, 0
    %v299 = vsel %vm294, %v285, 0
    %301 = vmatprep.subr.mxu0 %v282
    %302 = vmatpush1.msra.mxu0 %v262
    %303 = vmatprep.subr.mxu0 %v283
    %304 = vmatpush1.msra.mxu0 %v263
    %305 = vmatprep.subr.mxu0 0.0
    %306 = vmatpush1.msra.mxu0 0.0
    %307 = vmatprep.subr.mxu0 0.0
    %308 = vmatpush1.msra.mxu0 0.0
    %309 = vmatprep.subr.mxu0 0.0
    %310 = vmatpush1.msra.mxu0 0.0
    %311 = vmatprep.subr.mxu0 0.0
    %312 = vmatpush1.msra.mxu0 0.0
    %313 = vmatprep.subr.mxu0 0.0
    %314 = vmatpush1.msra.mxu0 0.0
    %315 = vmatprep.subr.mxu0 0.0
    %316 = vmatpush1.msra.mxu0 0.0
    %317 = vmatprep.subr.mxu0 0.0
    %318 = vmatpush1.msra.mxu0 0.0
    %319 = vmatprep.subr.mxu0 0.0
    %320 = vmatpush1.msra.mxu0 0.0
    %321 = vmatprep.subr.mxu0 0.0
    %322 = vmatpush1.msra.mxu0 0.0
    %323 = vmatprep.subr.mxu0 0.0
    %324 = vmatpush1.msra.mxu0 0.0
    %325 = vmatprep.subr.mxu0 0.0
    %326 = vmatpush1.msra.mxu0 0.0
    %327 = vmatprep.subr.mxu0 0.0
    %328 = vmatpush1.msra.mxu0 0.0
    %329 = vmatprep.subr.mxu0 0.0
    %330 = vmatpush1.msra.mxu0 0.0
    %331 = vmatprep.subr.mxu0 0.0
    %332 = vmatpush1.msra.mxu0 0.0
    %333 = vmatprep.subr.mxu0 0.0
    %334 = vmatpush1.msra.mxu0 0.0
    %335 = vmatprep.subr.mxu0 0.0
    %336 = vmatpush1.msra.mxu0 0.0
    %337 = vmatprep.subr.mxu0 0.0
    %338 = vmatpush1.msra.mxu0 0.0
    %339 = vmatprep.subr.mxu0 0.0
    %340 = vmatpush1.msra.mxu0 0.0
    %341 = vmatprep.subr.mxu0 0.0
    %342 = vmatpush1.msra.mxu0 0.0
    %343 = vmatprep.subr.mxu0 0.0
    %344 = vmatpush1.msra.mxu0 0.0
    %345 = vmatprep.subr.mxu0 0.0
    %346 = vmatpush1.msra.mxu0 0.0
    %347 = vmatprep.subr.mxu0 0.0
    %348 = vmatpush1.msra.mxu0 0.0
    %349 = vmatprep.subr.mxu0 0.0
    %350 = vmatpush1.msra.mxu0 0.0
    %351 = vmatprep.subr.mxu0 0.0
    %352 = vmatpush1.msra.mxu0 0.0
    %353 = vmatprep.subr.mxu0 0.0
    %354 = vmatpush1.msra.mxu0 0.0
    %355 = vmatprep.subr.mxu0 0.0
    %356 = vmatpush1.msra.mxu0 0.0
    %357 = vmatprep.subr.mxu0 0.0
    %358 = vmatpush1.msra.mxu0 0.0
    %359 = vmatprep.subr.mxu0 0.0
    %360 = vmatpush1.msra.mxu0 0.0
    %361 = vmatprep.subr.mxu0 0.0
    %362 = vmatpush1.msra.mxu0 0.0
    %363 = vmatprep.subr.mxu0 0.0
    %364 = vmatpush1.msra.mxu0 0.0
    %365 = vmatprep.mubr.f32.mxu0 0.0
    %366 = vmatmul.mubr.f32.gmra.mrb[0].mxu0 %v296
    %v367 = vpop.f32.mrb[0].mxu0
    %v368 = vadd.f32 %v288, %v367
    %v369 = vpop.f32.mrb[0].mxu0
    %v370 = vadd.f32 %v288, %v369
    %371 = vmatprep.mubr.f32.mxu0 0.0
    %372 = vmatmul.mubr.f32.gmra.mrb[0].mxu0 %v299
    %v373 = vpop.f32.mrb[0].mxu0
    %v374 = vadd.f32 %v292, %v373
    %v375 = vpop.f32.mrb[0].mxu0
    %v376 = vadd.f32 %v292, %v375
    %377 = vdwg.mxu0
    %v378 = vld [vmem:[%s5] sm:$0xff]
    %v379 = vld [vmem:[%s5 + $0x8] sm:$0xff]
    %v381 = vsel %vm96, %v378, 0
    %v384 = vsel %vm96, %v379, 0
    %386 = vmatprep.subr.mxu0 %v42
    %387 = vmatpush1.msra.mxu0 %v27
    %388 = vmatprep.subr.mxu0 0.0
    %389 = vmatpush1.msra.mxu0 0.0
    %390 = vmatprep.subr.mxu0 0.0
    %391 = vmatpush1.msra.mxu0 0.0
    %392 = vmatprep.subr.mxu0 0.0
    %393 = vmatpush1.msra.mxu0 0.0
    %394 = vmatprep.subr.mxu0 0.0
    %395 = vmatpush1.msra.mxu0 0.0
    %396 = vmatprep.subr.mxu0 0.0
    %397 = vmatpush1.msra.mxu0 0.0
    %398 = vmatprep.subr.mxu0 0.0
    %399 = vmatpush1.msra.mxu0 0.0
    %400 = vmatprep.subr.mxu0 0.0
    %401 = vmatpush1.msra.mxu0 0.0
    %402 = vmatprep.subr.mxu0 0.0
    %403 = vmatpush1.msra.mxu0 0.0
    %404 = vmatprep.subr.mxu0 0.0
    %405 = vmatpush1.msra.mxu0 0.0
    %406 = vmatprep.subr.mxu0 0.0
    %407 = vmatpush1.msra.mxu0 0.0
    %408 = vmatprep.subr.mxu0 0.0
    %409 = vmatpush1.msra.mxu0 0.0
    %410 = vmatprep.subr.mxu0 0.0
    %411 = vmatpush1.msra.mxu0 0.0
    %412 = vmatprep.subr.mxu0 0.0
    %413 = vmatpush1.msra.mxu0 0.0
    %414 = vmatprep.subr.mxu0 0.0
    %415 = vmatpush1.msra.mxu0 0.0
    %416 = vmatprep.subr.mxu0 0.0
    %417 = vmatpush1.msra.mxu0 0.0
    %418 = vmatprep.subr.mxu0 0.0
    %419 = vmatpush1.msra.mxu0 0.0
    %420 = vmatprep.subr.mxu0 0.0
    %421 = vmatpush1.msra.mxu0 0.0
    %422 = vmatprep.subr.mxu0 0.0
    %423 = vmatpush1.msra.mxu0 0.0
    %424 = vmatprep.subr.mxu0 0.0
    %425 = vmatpush1.msra.mxu0 0.0
    %426 = vmatprep.subr.mxu0 0.0
    %427 = vmatpush1.msra.mxu0 0.0
    %428 = vmatprep.subr.mxu0 0.0
    %429 = vmatpush1.msra.mxu0 0.0
    %430 = vmatprep.subr.mxu0 0.0
    %431 = vmatpush1.msra.mxu0 0.0
    %432 = vmatprep.subr.mxu0 0.0
    %433 = vmatpush1.msra.mxu0 0.0
    %434 = vmatprep.subr.mxu0 0.0
    %435 = vmatpush1.msra.mxu0 0.0
    %436 = vmatprep.subr.mxu0 0.0
    %437 = vmatpush1.msra.mxu0 0.0
    %438 = vmatprep.subr.mxu0 0.0
    %439 = vmatpush1.msra.mxu0 0.0
    %440 = vmatprep.subr.mxu0 0.0
    %441 = vmatpush1.msra.mxu0 0.0
    %442 = vmatprep.subr.mxu0 0.0
    %443 = vmatpush1.msra.mxu0 0.0
    %444 = vmatprep.subr.mxu0 0.0
    %445 = vmatpush1.msra.mxu0 0.0
    %446 = vmatprep.subr.mxu0 0.0
    %447 = vmatpush1.msra.mxu0 0.0
    %448 = vmatprep.subr.mxu0 0.0
    %449 = vmatpush1.msra.mxu0 0.0
    %450 = vmatprep.mubr.f32.mxu0 0.0
    %451 = vmatmul.mubr.f32.gmra.mrb[0].mxu0 %v381
    %v452 = vpop.f32.mrb[0].mxu0
    %v453 = vadd.f32 0.0, %v452
    %v454 = vpop.f32.mrb[0].mxu0
    %v455 = vadd.f32 0.0, %v454
    %456 = vmatprep.mubr.f32.mxu0 0.0
    %457 = vmatmul.mubr.f32.gmra.mrb[0].mxu0 %v384
    %v458 = vpop.f32.mrb[0].mxu0
    %v459 = vadd.f32 0.0, %v458
    %v460 = vpop.f32.mrb[0].mxu0
    %v461 = vadd.f32 0.0, %v460
    %462 = vdwg.mxu0
    %v463 = vadd.f32 %v368, %v453
    %v464 = vadd.f32 %v370, %v455
    %v465 = vadd.f32 %v374, %v459
    %v466 = vadd.f32 %v376, %v461
    %467 = vset.pattern.permute.xlu0 4
    %468 = vperm.xlu0 %467, %v25
    %v469 = vpop.permute.xlu0 %468
    %471 = vset.pattern.permute.xlu0 4
    %472 = vperm.xlu0 %471, %v26
    %v473 = vpop.permute.xlu0 %472
    %v475 = vadd.f32 %v463, %v469
    %v476 = vadd.f32 %v464, %v469
    %v477 = vadd.f32 %v465, %v473
    %v478 = vadd.f32 %v466, %v473
    %479 = vst [vmem:[#allocation2] sm:$0xff] %v475
    %480 = vst [vmem:[#allocation2 + $0x8] sm:$0xff] %v477
    %s481 = scalar_lea.vmem [#allocation2], 16
    %482 = vst [vmem:[%s481] sm:$0xff] %v476
    %483 = vst [vmem:[%s481 + $0x8] sm:$0xff] %v478
    // Predicated region
    $region26: #{pointcn_forward.1} parent=1 // pred_check
      _
    $region27: #{pointcn_forward.1} parent=1 // pred_check_branch
      %485 = sbr.rel (0) target = $region29
    $region28: #{pointcn_forward.1} parent=1 // pred_region
      %s487 = ssub.s32 512, 512
      %488 = vsyncadd [#allocation3], %s487
      %s489 = sshll.u32 [#allocation2], 4
      %s490 = int_to_ptr.vmem [resolvable:$true] %s489
      %495 = dma.vmem_to_hbm [thread:$0]  %s490, 512, %s6, [#allocation3], 128, 128, 8
    $region29: #{pointcn_forward.1} parent=1 // pred_fallthru
      _
    // Predicated region
    $region30: #{pointcn_forward.1} parent=1 // pred_check
      _
    $region31: #{pointcn_forward.1} parent=1 // pred_check_branch
      %497 = sbr.rel (0) target = $region33
    $region32: #{pointcn_forward.1} parent=1 // pred_region
      %498 = dma.done [#allocation3], 512
    $region33: #{pointcn_forward.1} parent=1 // pred_fallthru
      _
    %499 = vsyncpa [#allocation3], 1

</llo_original>
